<compile_context>
chip_gen: v6e
topology: v6e:2x2x1
jax: 0.10.0
libtpu: 0.0.40
codegen_flags: <defaults>
</compile_context>

<pallas_src>
import jax
import jax.numpy as jnp
from jax import lax
from jax.experimental import pallas as pl
from jax.experimental.pallas import tpu as pltpu


def _round_up(x: int, m: int) -> int:
    return ((x + m - 1) // m) * m


def _lm_criterion_kernel(inp_ref, tgt_ref, msk_ref, out_ref, acc_ref):
    """Grid = (row_tiles, vocab_tiles); vocab axis is the reduction ('arbitrary')."""
    k = pl.program_id(1)
    nk = pl.num_programs(1)

    @pl.when(k == 0)
    def _init():
        acc_ref[...] = jnp.zeros_like(acc_ref)

    tm, tv = inp_ref.shape
    n_chunks = tv // 128

    # Local (per vocab tile) target id: tgt - k*TV.  Lanes whose global vocab
    # id >= V (ragged edge) can never match a valid target, so edge garbage is
    # never selected.
    local_tgt = tgt_ref[...] - k * tv                          # (TM, 1) int32
    lane_iota = lax.broadcasted_iota(jnp.int32, (tm, 128), 1)  # reusable constant

    # Fused select + fold over 128-lane chunks; working set stays ~(TM,128).
    partial = jnp.zeros((tm, 128), jnp.float32)
    for j in range(n_chunks):                                  # static, lane-aligned slices
        chunk = inp_ref[:, j * 128:(j + 1) * 128]              # native dtype (bf16/f32)
        match = lane_iota == (local_tgt - j * 128)             # (TM, 128)
        partial = partial + jnp.where(match, chunk, 0).astype(jnp.float32)
    acc_ref[...] += partial                                    # one VMEM write per vocab tile

    @pl.when(k == nk - 1)
    def _finalize():
        # Single XLU lane reduce per row tile, then apply the mask.  The
        # mask-guarded select keeps ragged-edge garbage (and -inf*0) out.
        gathered = jnp.sum(acc_ref[...], axis=1, keepdims=True)   # (TM, 1)
        msk = msk_ref[...]
        out_ref[...] = jnp.where(msk != 0.0, -gathered * msk, 0.0)


def language_model_criterion(inp, target, mask, *, tm: int = 128, tv: int = 8192):
    """Pallas implementation of LanguageModelCriterion.forward.

    inp:    (B, T, V) float log-probs (f32 or bf16; streamed in native dtype)
    target: (B, T_full) int-like token ids
    mask:   (B, T_full) float mask
    returns scalar float32
    """
    B, T, V = inp.shape

    # Glue that mirrors the module: truncate target/mask to the input seq length.
    target = target[:, :T].astype(jnp.int32)
    mask = mask[:, :T].astype(jnp.float32)

    R = B * T
    inp2 = inp.reshape(R, V)          # lane-dense 2-D slab, native dtype, no pad/copy
    tgt2 = target.reshape(R, 1)
    msk2 = mask.reshape(R, 1)

    # (8,128)-aligned tile sizes; no padding of the arrays (ragged edge blocks).
    tm = max(8, (tm // 8) * 8)
    tv = max(128, (tv // 128) * 128)
    TM = min(tm, _round_up(R, 8))
    TV = min(tv, _round_up(V, 128))

    # v7x megacore: make sure the "parallel" row axis has >= 2 tiles when possible.
    if pl.cdiv(R, TM) < 2 and R > 8:
        TM = max(8, _round_up(pl.cdiv(R, 2), 8))

    grid = (pl.cdiv(R, TM), pl.cdiv(V, TV))

    # Generation-aware VMEM budget: double-buffered input tile + small extras.
    tile_bytes = TM * TV * jnp.dtype(inp2.dtype).itemsize
    vmem_limit = int(min(100 * 2 ** 20, max(8 * 2 ** 20, 2 * tile_bytes + 4 * 2 ** 20)))

    per_row_nll = pl.pallas_call(
        _lm_criterion_kernel,
        out_shape=jax.ShapeDtypeStruct((R, 1), jnp.float32),
        grid_spec=pltpu.PrefetchScalarGridSpec(
            num_scalar_prefetch=0,
            grid=grid,
            in_specs=[
                pl.BlockSpec((TM, TV), lambda i, k: (i, k)),   # streamed log-probs (native dtype)
                pl.BlockSpec((TM, 1), lambda i, k: (i, 0)),    # targets (resident per row tile)
                pl.BlockSpec((TM, 1), lambda i, k: (i, 0)),    # mask    (resident per row tile)
            ],
            out_specs=pl.BlockSpec((TM, 1), lambda i, k: (i, 0)),
            scratch_shapes=[pltpu.VMEM((TM, 128), jnp.float32)],
        ),
        compiler_params=pltpu.CompilerParams(
            dimension_semantics=("parallel", "arbitrary"),
            vmem_limit_bytes=vmem_limit,
        ),
    )(inp2, tgt2, msk2)

    # Tiny final reductions + divide (B*T elements) in plain JAX.
    num = jnp.sum(per_row_nll)
    den = jnp.sum(mask)               # same as torch.sum(mask); no zero-guard (matches torch)
    return num / den


def _reference(inp, target, mask):
    T = inp.shape[1]
    tgt_t = target[:, :T].astype(jnp.int32)
    msk_t = mask[:, :T].astype(jnp.float32)
    inp_f32 = inp.astype(jnp.float32)
    gathered = jnp.take_along_axis(inp_f32, tgt_t[:, :, None], axis=2)[:, :, 0]
    return jnp.sum(-gathered * msk_t) / jnp.sum(msk_t)


if __name__ == "__main__":
    key = jax.random.PRNGKey(0)

    # --- Case 1: small module-like shapes (batch=2, seq=8 of 10, vocab=32) -------------
    # Ragged vocab tile (V=32 < 128), two row tiles after the megacore adjustment.
    B, T_full, V = 2, 10, 32
    T = 8
    k1, k2, k3 = jax.random.split(key, 3)
    logits = jax.random.normal(k1, (B, T, V), dtype=jnp.float32)
    logprobs = jax.nn.log_softmax(logits, axis=-1)
    target = jax.random.randint(k2, (B, T_full), 0, V, dtype=jnp.int32)
    mask = (jax.random.uniform(k3, (B, T_full)) > 0.3).astype(jnp.float32)
    mask = mask.at[0, 0].set(1.0)   # ensure sum(mask) > 0

    loss = language_model_criterion(logprobs, target, mask)
    loss = jax.block_until_ready(loss)
    ref = _reference(logprobs, target, mask)
    assert jnp.allclose(loss, ref, rtol=1e-5, atol=1e-6), (loss, ref)

    # --- Case 2: exercise a real multi-tile grid (2 row tiles x 2 vocab tiles) ---------
    B2, T2, V2 = 4, 32, 512
    k4, k5, k6 = jax.random.split(jax.random.PRNGKey(1), 3)
    lp2 = jax.nn.log_softmax(jax.random.normal(k4, (B2, T2, V2), dtype=jnp.float32), axis=-1)
    tg2 = jax.random.randint(k5, (B2, T2 + 3), 0, V2, dtype=jnp.int32)
    mk2 = (jax.random.uniform(k6, (B2, T2 + 3)) > 0.5).astype(jnp.float32)
    mk2 = mk2.at[0, 0].set(1.0)

    loss2 = language_model_criterion(lp2, tg2, mk2, tm=64, tv=256)
    loss2 = jax.block_until_ready(loss2)
    ref2 = _reference(lp2, tg2, mk2)
    assert jnp.allclose(loss2, ref2, rtol=1e-5, atol=1e-6), (loss2, ref2)

    # --- Case 3: ragged rows + ragged vocab + bf16 streaming ---------------------------
    B3, T3, V3 = 3, 7, 500
    k7, k8, k9 = jax.random.split(jax.random.PRNGKey(2), 3)
    lp3 = jax.nn.log_softmax(
        jax.random.normal(k7, (B3, T3, V3), dtype=jnp.float32), axis=-1
    ).astype(jnp.bfloat16)
    tg3 = jax.random.randint(k8, (B3, T3 + 2), 0, V3, dtype=jnp.int32)
    mk3 = (jax.random.uniform(k9, (B3, T3 + 2)) > 0.4).astype(jnp.float32)
    mk3 = mk3.at[0, 0].set(1.0)

    loss3 = language_model_criterion(lp3, tg3, mk3)
    loss3 = jax.block_until_ready(loss3)
    ref3 = _reference(lp3, tg3, mk3)
    assert jnp.allclose(loss3, ref3, rtol=1e-5, atol=1e-5), (loss3, ref3)

    print("KERNEL_OK")
</pallas_src>

<mosaic_0001>
module attributes {stable_mosaic.version = 11 : i64} {
  func.func @_lm_criterion_kernel(%arg0: i32, %arg1: i32, %arg2: memref<8x128xf32, #tpu.memory_space<vmem>>, %arg3: memref<8x1xi32, #tpu.memory_space<vmem>>, %arg4: memref<8x1xf32, #tpu.memory_space<vmem>>, %arg5: memref<8x1xf32, #tpu.memory_space<vmem>>, %arg6: memref<8x128xf32, #tpu.memory_space<vmem>>) attributes {dimension_semantics = [#tpu.dimension_semantics<parallel>, #tpu.dimension_semantics<arbitrary>], iteration_bounds = array<i64: 2, 1>, scalar_prefetch = 0 : i64, scratch_operands = 1 : i64, tpu.core_type = #tpu.core_type<tc>, window_params = [{transform_indices = @transform_0, window_bounds = array<i64: 8, 128>}, {transform_indices = @transform_1, window_bounds = array<i64: 8, 1>}, {transform_indices = @transform_2, window_bounds = array<i64: 8, 1>}, {transform_indices = @transform_3, window_bounds = array<i64: 8, 1>}]} {
    %c0_i32 = arith.constant 0 : i32
    %0 = arith.cmpi eq, %arg1, %c0_i32 : i32
    %1 = arith.extui %0 : i1 to i32
    %c0_i32_0 = arith.constant 0 : i32
    %2 = arith.cmpi ne, %1, %c0_i32_0 : i32
    scf.if %2 {
      %cst_12 = arith.constant 0.000000e+00 : f32
      %24 = vector.broadcast %cst_12 : f32 to vector<8x128xf32>
      %c0_13 = arith.constant 0 : index
      %c0_14 = arith.constant 0 : index
      %25 = vector.load %arg6[%c0_13, %c0_14] : memref<8x128xf32, #tpu.memory_space<vmem>>, vector<8x128xf32>
      tpu.vector_store %arg6[%c0_13, %c0_14], %24 {strides = array<i32>} : memref<8x128xf32, #tpu.memory_space<vmem>>, vector<8x128xf32>,
    } else {
    }
    %c0 = arith.constant 0 : index
    %c0_1 = arith.constant 0 : index
    %3 = vector.load %arg3[%c0, %c0_1] : memref<8x1xi32, #tpu.memory_space<vmem>>, vector<8x1xi32>
    %c128_i32 = arith.constant 128 : i32
    %4 = arith.muli %arg1, %c128_i32 : i32
    %5 = vector.broadcast %4 : i32 to vector<8x1xi32>
    %6 = arith.subi %3, %5 : vector<8x1xi32>
    %7 = tpu.iota {dimensions = array<i32: 1>} : vector<8x128xi32>
    %cst = arith.constant 0.000000e+00 : f32
    %8 = vector.broadcast %cst : f32 to vector<8x128xf32>
    %c0_2 = arith.constant 0 : index
    %c0_3 = arith.constant 0 : index
    %9 = vector.load %arg2[%c0_2, %c0_3] : memref<8x128xf32, #tpu.memory_space<vmem>>, vector<8x128xf32>
    %c0_i32_4 = arith.constant 0 : i32
    %10 = vector.broadcast %c0_i32_4 : i32 to vector<8x1xi32>
    %11 = arith.subi %6, %10 : vector<8x1xi32>
    %12 = vector.broadcast %11 : vector<8x1xi32> to vector<8x128xi32>
    %13 = arith.cmpi eq, %7, %12 : vector<8x128xi32>
    %c0_i32_5 = arith.constant 0 : i32
    %14 = arith.sitofp %c0_i32_5 : i32 to f32
    %15 = vector.broadcast %14 : f32 to vector<8x128xf32>
    %16 = arith.select %13, %9, %15 : vector<8x128xi1>, vector<8x128xf32>
    %17 = arith.addf %8, %16 : vector<8x128xf32>
    %c0_6 = arith.constant 0 : index
    %c0_7 = arith.constant 0 : index
    %18 = vector.load %arg6[%c0_6, %c0_7] : memref<8x128xf32, #tpu.memory_space<vmem>>, vector<8x128xf32>
    %19 = arith.addf %18, %17 : vector<8x128xf32>
    %c0_8 = arith.constant 0 : index
    %c0_9 = arith.constant 0 : index
    %20 = vector.load %arg6[%c0_8, %c0_9] : memref<8x128xf32, #tpu.memory_space<vmem>>, vector<8x128xf32>
    tpu.vector_store %arg6[%c0_8, %c0_9], %19 {strides = array<i32>} : memref<8x128xf32, #tpu.memory_space<vmem>>, vector<8x128xf32>,
    %c0_i32_10 = arith.constant 0 : i32
    %21 = arith.cmpi eq, %arg1, %c0_i32_10 : i32
    %22 = arith.extui %21 : i1 to i32
    %c0_i32_11 = arith.constant 0 : i32
    %23 = arith.cmpi ne, %22, %c0_i32_11 : i32
    scf.if %23 {
      %c0_12 = arith.constant 0 : index
      %c0_13 = arith.constant 0 : index
      %24 = vector.load %arg6[%c0_12, %c0_13] : memref<8x128xf32, #tpu.memory_space<vmem>>, vector<8x128xf32>
      %cst_14 = arith.constant dense<0.000000e+00> : vector<8xf32>
      %25 = vector.multi_reduction <add>, %24, %cst_14 [1] : vector<8x128xf32> to vector<8xf32>
      %26 = vector.shape_cast %25 : vector<8xf32> to vector<8x1xf32>
      %c0_15 = arith.constant 0 : index
      %c0_16 = arith.constant 0 : index
      %27 = vector.load %arg4[%c0_15, %c0_16] : memref<8x1xf32, #tpu.memory_space<vmem>>, vector<8x1xf32>
      %cst_17 = arith.constant 0.000000e+00 : f32
      %28 = vector.broadcast %cst_17 : f32 to vector<8x1xf32>
      %29 = arith.cmpf one, %27, %28 : vector<8x1xf32>
      %cst_18 = arith.constant 0.000000e+00 : f32
      %30 = vector.broadcast %cst_18 : f32 to vector<8x1xf32>
      %31 = arith.subf %30, %26 : vector<8x1xf32>
      %32 = arith.mulf %31, %27 : vector<8x1xf32>
      %cst_19 = arith.constant 0.000000e+00 : f32
      %33 = vector.broadcast %cst_19 : f32 to vector<8x1xf32>
      %34 = arith.select %29, %32, %33 : vector<8x1xi1>, vector<8x1xf32>
      %c0_20 = arith.constant 0 : index
      %c0_21 = arith.constant 0 : index
      %35 = vector.load %arg5[%c0_20, %c0_21] : memref<8x1xf32, #tpu.memory_space<vmem>>, vector<8x1xf32>
      tpu.vector_store %arg5[%c0_20, %c0_21], %34 {strides = array<i32>} : memref<8x1xf32, #tpu.memory_space<vmem>>, vector<8x1xf32>,
    } else {
    }
    return
  }
  func.func @transform_0(%arg0: i32, %arg1: i32) -> (i32, i32) {
    %c0_i32 = arith.constant 0 : i32
    return %arg0, %arg1 : i32, i32
  }
  func.func @transform_1(%arg0: i32, %arg1: i32) -> (i32, i32) {
    %c0_i32 = arith.constant 0 : i32
    %c0_i32_0 = arith.constant 0 : i32
    return %arg0, %c0_i32 : i32, i32
  }
  func.func @transform_2(%arg0: i32, %arg1: i32) -> (i32, i32) {
    %c0_i32 = arith.constant 0 : i32
    %c0_i32_0 = arith.constant 0 : i32
    return %arg0, %c0_i32 : i32, i32
  }
  func.func @transform_3(%arg0: i32, %arg1: i32) -> (i32, i32) {
    %c0_i32 = arith.constant 0 : i32
    %c0_i32_0 = arith.constant 0 : i32
    return %arg0, %c0_i32 : i32, i32
  }
}

</mosaic_0001>

<llo_original>
// kernel: tpu_custom_call.1
$region0: #{tpu_custom_call.1}
  #allocation0 [shape = 'u32[]', space=smem, size = 0x4, offset = 0x4, fixed_abs, tag = 'smem constant byte address 0x4 - core index']
  #allocation1 [shape = 'u32[144,128]{1,0:T(1,128)}', space=vmem, size = 0x12000, scoped, tag = 'internal scratch']
  #allocation2 [shape = 'f32[8,128]{1,0:T(8,128)}', space=vmem, size = 0x1000, scoped, tag = 'scratch operand']
  %s0 = inlined_call_operand.vmem [shape: f32[16,32], index: 0, kind: input, shape index: {}]
  %s1 = inlined_call_operand.vmem [shape: s32[16,1], index: 1, kind: input, shape index: {}]
  %s2 = inlined_call_operand.vmem [shape: f32[16,1], index: 2, kind: input, shape index: {}]
  %s3 = inlined_call_operand.vmem [shape: f32[16,1], index: 3, kind: output, shape index: {}]
  %s4 = sld [smem:[#allocation0]]
  $region53: #{tpu_custom_call.1} parent=0
    _
  %s6 = ssub.s32 1, %s4
  %s7 = scalar_select 0, %s6, %s4
  loop: start=0, step=1, limit=4
  $region2: #{tpu_custom_call.1} parent=0 // loop_pre_header
    _
  $region3: #{tpu_custom_call.1} parent=0 // loop_header
    %s9 = sphi 0, %s13
    %p10 = scmp.ge.s32.totalorder %s9, 4
    %s16 = sphi 0, %s28
    %s17 = sphi 0, %s24
    %s18 = sphi 0, %s16
    %s19 = sphi 0, %s17
    %s20 = sphi 0, %s18
    %s21 = sphi 0, %s19
    %s33 = sphi 0, %s35
    %s36 = sphi 0, %s33
    %s37 = sphi 0, %s36
    %s53 = sphi 0, %s37
    %s59 = sphi 0, %s61
    %s62 = sphi 0, %s59
    %s63 = sphi 0, %s62
    %s79 = sphi 0, %s63
    %s85 = sphi 0, %s87
    %s88 = sphi 0, %s85
    %s89 = sphi 0, %s88
    %s105 = sphi 0, %s89
    %s111 = sphi 0, %s113
    %s114 = sphi 0, %s111
    %s115 = sphi 0, %s114
    %s131 = sphi 0, %s115
  $region4: #{tpu_custom_call.1} parent=0 // loop_header_branch
    %12 = sbr.rel (%p10) target = $region8
  $region5: #{tpu_custom_call.1} parent=0 // loop_body
    %s14 = ssub.s32 %s9, 1
    %s15 = ssub.s32 %s9, 2
    %s22 = sadd.s32 1, %s17
    %p23 = scmp.ge.s32.totalorder %s22, 1
    %s24 = scalar_select %p23, 0, %s22
    %s25 = sadd.s32 1, %s16
    %s26 = scalar_select %p23, %s25, %s16
    %p27 = scmp.ge.s32.totalorder %s26, 2
    %s28 = scalar_select %p27, 0, %s26
    %s29 = ssub.s32 %s16, %s28
    %s30 = ssub.s32 %s17, %s24
    %s31 = sor.u32 %s29, %s30
    %p32 = scmp.eq.s32.totalorder %s31, 0
    %s34 = sadd.s32 %s33, 1
    %s35 = scalar_select %p32, %s33, %s34
    %p38 = pneg %p32
    %p39 = scmp.eq.s32.totalorder %s9, 1
    %p40 = por %p38, %p39
    %p41 = scmp.ne.s32.totalorder %s33, %s36
    %p42 = scmp.eq.s32.totalorder %s9, 0
    %p43 = por %p41, %p42
    %p44 = scmp.ne.s32.totalorder %s33, %s36
    %p45 = scmp.eq.s32.totalorder %s14, 1
    %p46 = por %p44, %p45
    %p47 = scmp.ne.s32.totalorder %s36, %s37
    %p48 = scmp.eq.s32.totalorder %s14, 0
    %p49 = por %p47, %p48
    %p50 = scmp.ne.s32.totalorder %s36, %s37
    %p51 = scmp.eq.s32.totalorder %s15, 1
    %p52 = por %p50, %p51
    %p54 = scmp.ne.s32.totalorder %s37, %s53
    %p55 = scmp.eq.s32.totalorder %s15, 0
    %p56 = por %p54, %p55
    %s57 = ssub.s32 %s16, %s28
    %p58 = scmp.eq.s32.totalorder %s57, 0
    %s60 = sadd.s32 %s59, 1
    %s61 = scalar_select %p58, %s59, %s60
    %p64 = pneg %p58
    %p65 = scmp.eq.s32.totalorder %s9, 1
    %p66 = por %p64, %p65
    %p67 = scmp.ne.s32.totalorder %s59, %s62
    %p68 = scmp.eq.s32.totalorder %s9, 0
    %p69 = por %p67, %p68
    %p70 = scmp.ne.s32.totalorder %s59, %s62
    %p71 = scmp.eq.s32.totalorder %s14, 1
    %p72 = por %p70, %p71
    %p73 = scmp.ne.s32.totalorder %s62, %s63
    %p74 = scmp.eq.s32.totalorder %s14, 0
    %p75 = por %p73, %p74
    %p76 = scmp.ne.s32.totalorder %s62, %s63
    %p77 = scmp.eq.s32.totalorder %s15, 1
    %p78 = por %p76, %p77
    %p80 = scmp.ne.s32.totalorder %s63, %s79
    %p81 = scmp.eq.s32.totalorder %s15, 0
    %p82 = por %p80, %p81
    %s83 = ssub.s32 %s16, %s28
    %p84 = scmp.eq.s32.totalorder %s83, 0
    %s86 = sadd.s32 %s85, 1
    %s87 = scalar_select %p84, %s85, %s86
    %p90 = pneg %p84
    %p91 = scmp.eq.s32.totalorder %s9, 1
    %p92 = por %p90, %p91
    %p93 = scmp.ne.s32.totalorder %s85, %s88
    %p94 = scmp.eq.s32.totalorder %s9, 0
    %p95 = por %p93, %p94
    %p96 = scmp.ne.s32.totalorder %s85, %s88
    %p97 = scmp.eq.s32.totalorder %s14, 1
    %p98 = por %p96, %p97
    %p99 = scmp.ne.s32.totalorder %s88, %s89
    %p100 = scmp.eq.s32.totalorder %s14, 0
    %p101 = por %p99, %p100
    %p102 = scmp.ne.s32.totalorder %s88, %s89
    %p103 = scmp.eq.s32.totalorder %s15, 1
    %p104 = por %p102, %p103
    %p106 = scmp.ne.s32.totalorder %s89, %s105
    %p107 = scmp.eq.s32.totalorder %s15, 0
    %p108 = por %p106, %p107
    %s109 = ssub.s32 %s16, %s28
    %p110 = scmp.eq.s32.totalorder %s109, 0
    %s112 = sadd.s32 %s111, 1
    %s113 = scalar_select %p110, %s111, %s112
    %p116 = pneg %p110
    %p117 = scmp.eq.s32.totalorder %s9, 1
    %p118 = por %p116, %p117
    %p119 = scmp.ne.s32.totalorder %s111, %s114
    %p120 = scmp.eq.s32.totalorder %s9, 0
    %p121 = por %p119, %p120
    %p122 = scmp.ne.s32.totalorder %s111, %s114
    %p123 = scmp.eq.s32.totalorder %s14, 1
    %p124 = por %p122, %p123
    %p125 = scmp.ne.s32.totalorder %s114, %s115
    %p126 = scmp.eq.s32.totalorder %s14, 0
    %p127 = por %p125, %p126
    %p128 = scmp.ne.s32.totalorder %s114, %s115
    %p129 = scmp.eq.s32.totalorder %s15, 1
    %p130 = por %p128, %p129
    %p132 = scmp.ne.s32.totalorder %s115, %s131
    %p133 = scmp.eq.s32.totalorder %s15, 0
    %p134 = por %p132, %p133
    %p135 = scmp.le.s32.totalorder 1, %s9
    %p136 = scmp.lt.s32.totalorder %s9, 3
    %p137 = pnand %p135, %p136
    %p138 = pneg %p137
    // Predicated region
    $region9: #{tpu_custom_call.1} parent=5 // pred_check
      _
    $region10: #{tpu_custom_call.1} parent=5 // pred_check_branch
      %140 = sbr.rel (%p137) target = $region12
    $region11: #{tpu_custom_call.1} parent=5 // pred_region
      %s141 = ssub.s32 %s9, 1
    $region12: #{tpu_custom_call.1} parent=5 // pred_fallthru
      _
    %p142 = scmp.lt.s32.totalorder %s9, 2
    // Predicated region
    $region13: #{tpu_custom_call.1} parent=5 // pred_check
      %p143 = pneg %p142
    $region14: #{tpu_custom_call.1} parent=5 // pred_check_branch
      %145 = sbr.rel (%p143) target = $region16
    $region15: #{tpu_custom_call.1} parent=5 // pred_region
      // Predicated region
      $region17: #{tpu_custom_call.1} parent=15 // pred_check
        %p146 = pneg %p43
      $region18: #{tpu_custom_call.1} parent=15 // pred_check_branch
        %148 = sbr.rel (%p146) target = $region20
      $region19: #{tpu_custom_call.1} parent=15 // pred_region
        %p149 = scmp.lt.s32.totalorder %s16, 1
        %s150 = scalar_select %p149, %s16, 1
        %p151 = scmp.lt.s32.totalorder %s17, 0
        %s152 = scalar_select %p151, %s17, 0
        %s153 = sadd.s32 %s152, %s150
        %s154 = smul.addr %s153, 8
        %s155 = scalar_lea.vmem %s0, %s154
      $region20: #{tpu_custom_call.1} parent=15 // pred_fallthru
        _
      // Predicated region
      $region21: #{tpu_custom_call.1} parent=15 // pred_check
        %p156 = pneg %p69
      $region22: #{tpu_custom_call.1} parent=15 // pred_check_branch
        %158 = sbr.rel (%p156) target = $region24
      $region23: #{tpu_custom_call.1} parent=15 // pred_region
        %p159 = scmp.lt.s32.totalorder %s16, 1
        %s160 = scalar_select %p159, %s16, 1
        %s161 = smul.addr %s160, 8
        %s162 = scalar_lea.vmem %s1, %s161
      $region24: #{tpu_custom_call.1} parent=15 // pred_fallthru
        _
      // Predicated region
      $region25: #{tpu_custom_call.1} parent=15 // pred_check
        %p163 = pneg %p95
      $region26: #{tpu_custom_call.1} parent=15 // pred_check_branch
        %165 = sbr.rel (%p163) target = $region28
      $region27: #{tpu_custom_call.1} parent=15 // pred_region
        %p166 = scmp.lt.s32.totalorder %s16, 1
        %s167 = scalar_select %p166, %s16, 1
        %s168 = smul.addr %s167, 8
        %s169 = scalar_lea.vmem %s2, %s168
      $region28: #{tpu_custom_call.1} parent=15 // pred_fallthru
        _
    $region16: #{tpu_custom_call.1} parent=5 // pred_fallthru
      _
    %p170 = scmp.le.s32.totalorder 1, %s9
    %p171 = scmp.lt.s32.totalorder %s9, 3
    %p172 = pnand %p170, %p171
    %p173 = pneg %p172
    // Predicated region
    $region29: #{tpu_custom_call.1} parent=5 // pred_check
      _
    $region30: #{tpu_custom_call.1} parent=5 // pred_check_branch
      %175 = sbr.rel (%p172) target = $region32
    $region31: #{tpu_custom_call.1} parent=5 // pred_region
      %s176 = ssub.s32 %s9, 1
      %p177 = scmp.lt.s32.totalorder %s18, 1
      %s178 = scalar_select %p177, %s18, 1
      %p179 = scmp.lt.s32.totalorder %s19, 0
      %s180 = scalar_select %p179, %s19, 0
      %s181 = sadd.s32 %s180, %s178
      %s182 = smul.addr %s181, 8
      %s183 = scalar_lea.vmem %s0, %s182
      %p184 = pneg %p49
      %p185 = pneg %p46
      %p186 = scmp.lt.s32.totalorder %s18, 1
      %s187 = scalar_select %p186, %s18, 1
      %s188 = smul.addr %s187, 8
      %s189 = scalar_lea.vmem %s1, %s188
      %p190 = pneg %p75
      %p191 = pneg %p72
      %p192 = scmp.lt.s32.totalorder %s18, 1
      %s193 = scalar_select %p192, %s18, 1
      %s194 = smul.addr %s193, 8
      %s195 = scalar_lea.vmem %s2, %s194
      %p196 = pneg %p101
      %p197 = pneg %p98
      %p198 = pneg %p127
      %p199 = pneg %p124
      %p200 = scmp.lt.s32.totalorder %s18, 1
      %s201 = scalar_select %p200, %s18, 1
      %s202 = smul.addr %s201, 8
      %s203 = scalar_lea.vmem %s3, %s202
      %p204 = scmp.lt.s32.totalorder %s18, 1
      %s205 = scalar_select %p204, %s18, 1
      %p206 = scmp.lt.s32.totalorder %s19, 0
      %s207 = scalar_select %p206, %s19, 0
      %s208 = sadd.s32 %s207, %s205
      %s209 = smul.addr %s208, 8
      %s210 = scalar_lea.vmem %s0, %s209
      %p211 = scmp.lt.s32.totalorder %s18, 1
      %s212 = scalar_select %p211, %s18, 1
      %s213 = smul.addr %s212, 8
      %s214 = scalar_lea.vmem %s1, %s213
      %p215 = scmp.lt.s32.totalorder %s18, 1
      %s216 = scalar_select %p215, %s18, 1
      %s217 = smul.addr %s216, 8
      %s218 = scalar_lea.vmem %s2, %s217
      %p219 = scmp.lt.s32.totalorder %s18, 1
      %s220 = scalar_select %p219, %s18, 1
      %s221 = smul.addr %s220, 8
      %s222 = scalar_lea.vmem %s3, %s221
      %p223 = scmp.eq.s32.totalorder %s19, 0
      // Predicated region
      $region33: #{tpu_custom_call.1} parent=31 // pred_check
        %p224 = pneg %p223
      $region34: #{tpu_custom_call.1} parent=31 // pred_check_branch
        %226 = sbr.rel (%p224) target = $region36
      $region35: #{tpu_custom_call.1} parent=31 // pred_region
        %227 = vst [vmem:[#allocation2] sm:$0xff] 0.0
      $region36: #{tpu_custom_call.1} parent=31 // pred_fallthru
        _
      %v228 = vld [vmem:[%s214] sm:$0xff]
      %s229 = smul.u32 %s19, 128
      %v230 = vstv %s229
      %v231 = vsub.s32 %v228, %v230
      %v232 = vlaneseq
      %v233 = vand.u32 %v232, 127
      %v234 = vld [vmem:[%s210] sm:$0xff]
      %235 = vset.pattern.permute.xlu0 0
      %236 = vperm.xlu0 %235, %v231
      %v237 = vpop.permute.xlu0 %236
      %vm238 = vcmp.eq.s32.totalorder %v233, %v237
      %v239 = vsel %vm238, %v234, 0.0
      %v240 = vadd.f32 %v239, 0.0
      %v241 = vld [vmem:[#allocation2] sm:$0xff]
      %v242 = vadd.f32 %v241, %v240
      %243 = vst [vmem:[#allocation2] sm:$0xff] %v242
      // Predicated region
      $region37: #{tpu_custom_call.1} parent=31 // pred_check
        %p244 = pneg %p223
      $region38: #{tpu_custom_call.1} parent=31 // pred_check_branch
        %246 = sbr.rel (%p244) target = $region40
      $region39: #{tpu_custom_call.1} parent=31 // pred_region
        %v247 = vld [vmem:[#allocation2] sm:$0xff]
        %248 = vadd.xlane.f32.xlu0 %v247
        %v249 = vpop.xlane.xlu0 %248
        %v250 = vld [vmem:[%s218] sm:$0xff]
        %vm251 = vcmp.ne.f32.partialorder %v250, 0.0
        %v252 = vsub.f32 0.0, %v249
        %v253 = vmul.f32 %v252, %v250
        %v254 = vsel %vm251, %v253, 0.0
        %vm255 = vcmask 7168
        %256 = vst.msk [vmem:[%s222] sm:$0xff] %vm255, %v254
      $region40: #{tpu_custom_call.1} parent=31 // pred_fallthru
        _
      %p257 = scmp.lt.s32.totalorder %s18, 1
      %s258 = scalar_select %p257, %s18, 1
      %s259 = smul.addr %s258, 8
      %s260 = scalar_lea.vmem %s3, %s259
      // Predicated region
      $region41: #{tpu_custom_call.1} parent=31 // pred_check
        %p261 = pneg %p124
      $region42: #{tpu_custom_call.1} parent=31 // pred_check_branch
        %263 = sbr.rel (%p261) target = $region44
      $region43: #{tpu_custom_call.1} parent=31 // pred_region
        _
      $region44: #{tpu_custom_call.1} parent=31 // pred_fallthru
        _
    $region32: #{tpu_custom_call.1} parent=5 // pred_fallthru
      _
    %p264 = scmp.le.s32.totalorder 2, %s9
    // Predicated region
    $region45: #{tpu_custom_call.1} parent=5 // pred_check
      %p265 = pneg %p264
    $region46: #{tpu_custom_call.1} parent=5 // pred_check_branch
      %267 = sbr.rel (%p265) target = $region48
    $region47: #{tpu_custom_call.1} parent=5 // pred_region
      %s268 = ssub.s32 %s9, 2
      // Predicated region
      $region49: #{tpu_custom_call.1} parent=47 // pred_check
        %p269 = pneg %p130
      $region50: #{tpu_custom_call.1} parent=47 // pred_check_branch
        %271 = sbr.rel (%p269) target = $region52
      $region51: #{tpu_custom_call.1} parent=47 // pred_region
        %p272 = scmp.lt.s32.totalorder %s20, 1
        %s273 = scalar_select %p272, %s20, 1
        %s274 = smul.addr %s273, 8
        %s275 = scalar_lea.vmem %s3, %s274
      $region52: #{tpu_custom_call.1} parent=47 // pred_fallthru
        _
    $region48: #{tpu_custom_call.1} parent=5 // pred_fallthru
      _
  $region6: #{tpu_custom_call.1} parent=0 // loop_footer
    %s13 = sadd.s32 1, %s9
  $region7: #{tpu_custom_call.1} parent=0 // loop_footer_branch
    %8 = sbr.rel target = $region3
  $region8: #{tpu_custom_call.1} parent=0 // loop_exit
    _

</llo_original>
